<compile_context>
chip_gen: v5e
topology: v5e:2x2
jax: 0.10.0
libtpu: 0.0.40
codegen_flags: <defaults>
</compile_context>

<pallas_src>
import functools

import jax
import jax.numpy as jnp
from jax.experimental import pallas as pl
from jax.experimental.pallas import tpu as pltpu


def _focal_weight(one_minus_p, gamma):
    """(1 - p)^gamma specialized on the static gamma (keeps the EUP free)."""
    g = float(gamma)
    if g == int(g) and 1.0 <= g <= 8.0:
        w = one_minus_p
        for _ in range(int(g) - 1):
            w = w * one_minus_p
        return w
    return jnp.power(one_minus_p, g)


def _nfl_kernel(tgt_ref, logits_ref, loss_ref, *, gamma, n_total, tile_n):
    i = pl.program_id(0)

    x = logits_ref[...].astype(jnp.float32)                    # (T, C)

    # log_softmax along the class (lane) axis; reuse the exponentials for p.
    m = jnp.max(x, axis=1, keepdims=True)                      # (T, 1)
    z = x - m
    e = jnp.exp(z)                                             # single full-tile exp
    s = jnp.sum(e, axis=1, keepdims=True)                      # (T, 1)
    logpt = z - jnp.log(s)                                     # (T, C)

    # Weighted negative log-prob: (1-p)^gamma * (-logpt).  Its row-sum is the
    # normalizor and its value at the target class is the loss numerator, so a
    # single array serves both (no second exp / pow per row).
    if float(gamma) == 0.0:
        nwl = -logpt                                           # weight == 1
    else:
        p = e / s                                              # reuse exp; exact divide
        nwl = _focal_weight(1.0 - p, gamma) * (-logpt)

    normalizor = jnp.sum(nwl, axis=1, keepdims=True)           # (T, 1)

    # Gather at the target class via one-hot select (no dynamic gather on TPU).
    tgt = tgt_ref[...]                                         # (T, 1) int32
    col = jax.lax.broadcasted_iota(jnp.int32, nwl.shape, 1)
    num = jnp.sum(jnp.where(col == tgt, nwl, 0.0), axis=1, keepdims=True)

    loss = num / normalizor                                    # (T, 1)

    # Mask rows beyond the true batch (ragged last block carries unspecified
    # data; the select is NaN/Inf-safe).  Out-of-bounds output rows are
    # dropped by Pallas anyway; the mask keeps in-bounds padded rows at 0.
    row = i * tile_n + jax.lax.broadcasted_iota(jnp.int32, loss.shape, 0)
    loss_ref[...] = jnp.where(row < n_total, loss, 0.0)


def _round_up(x, m):
    return -(-x // m) * m


def _choose_tile_n(n, c, dtype):
    """Largest sublane-aligned row tile keeping double-buffered VMEM ~<=20 MiB."""
    itemsize = jnp.dtype(dtype).itemsize
    sub = 8 if itemsize >= 4 else 16                 # sublane packing (f32 vs bf16)
    lane_c = _round_up(max(c, 1), 128)               # class axis pads to 128 lanes
    # Double-buffered per-row VMEM: logits tile + lane-padded int32 target
    # tile + lane-padded f32 per-row-loss tile.
    per_row = 2 * (lane_c * itemsize + 128 * 4 + 128 * 4)
    budget = 20 * 1024 * 1024                        # stays under v7x's 32 MiB scoped VMEM
    tile = max(sub, min(8192, budget // per_row))
    tile = (tile // sub) * sub
    n_aligned = max(sub, (n // sub) * sub)           # never exceed the batch
    return min(tile, n_aligned)


def normalized_focal_loss(logits, target, *, gamma=0.0, scale=1.0,
                          size_average=True, tile_n=None):
    """logits: (N, C) float (f32 or bf16), target: (N,) int. Returns scalar f32."""
    n, c = logits.shape
    if tile_n is None:
        tile_n = _choose_tile_n(n, c, logits.dtype)
    assert tile_n % 8 == 0, "tile_n must be a multiple of 8"

    # TODO(synk): for small C (default 10) repack (N, C) -> (N/k, k*C) in the
    # wrapper with segmented lane reductions to lift the ~8% lane utilization;
    # for vocab-scale C tile the class axis with an online log-sum-exp instead
    # of keeping it whole per tile.

    tgt2d = target.reshape(n, 1).astype(jnp.int32)

    # Only pad when the whole batch is smaller than one sublane-aligned tile
    # (at most 15 rows); ragged multi-tile batches rely on partial blocks.
    n_rows = n
    if n < tile_n:
        pad = tile_n - n
        logits = jnp.pad(logits, ((0, pad), (0, 0)))
        tgt2d = jnp.pad(tgt2d, ((0, pad), (0, 0)))
        n_rows = tile_n

    kernel = functools.partial(_nfl_kernel, gamma=float(gamma),
                               n_total=int(n), tile_n=int(tile_n))

    per_row = pl.pallas_call(
        kernel,
        out_shape=jax.ShapeDtypeStruct((n_rows, 1), jnp.float32),
        grid=(pl.cdiv(n_rows, tile_n),),
        in_specs=[
            pl.BlockSpec((tile_n, 1), lambda i: (i, 0)),   # targets (T, 1)
            pl.BlockSpec((tile_n, c), lambda i: (i, 0)),   # logits  (T, C)
        ],
        out_specs=pl.BlockSpec((tile_n, 1), lambda i: (i, 0)),  # per-row loss
        compiler_params=pltpu.CompilerParams(
            dimension_semantics=("parallel",),             # megacore on v7x
            vmem_limit_bytes=32 * 1024 * 1024),
    )(tgt2d, logits)

    total = jnp.sum(per_row) * scale
    if size_average:
        total = total / n
    return total


def _reference(logits, target, *, gamma=0.0, scale=1.0, size_average=True):
    logits = logits.astype(jnp.float32)
    logpt = jax.nn.log_softmax(logits, axis=1)
    normalizor = jnp.sum(-jnp.power(1.0 - jnp.exp(logpt), gamma) * logpt, axis=1)
    logpt_t = jnp.take_along_axis(logpt, target.reshape(-1, 1), axis=1).reshape(-1)
    pt = jnp.exp(logpt_t)
    loss = -jnp.power(1.0 - pt, gamma) * logpt_t
    loss = scale * loss / normalizor
    return jnp.mean(loss) if size_average else jnp.sum(loss)


if __name__ == "__main__":
    key = jax.random.PRNGKey(0)
    k1, k2, k3, k4, k5, k6 = jax.random.split(key, 6)

    C = 10  # num_classes default in the module

    # case 1: single tile, gamma=2 (common focal setting, integer-pow path)
    N = 8
    logits = jax.random.normal(k1, (N, C), dtype=jnp.float32)
    target = jax.random.randint(k2, (N,), 0, C, dtype=jnp.int32)
    out = jax.block_until_ready(
        normalized_focal_loss(logits, target, gamma=2.0, scale=1.0))
    ref = _reference(logits, target, gamma=2.0, scale=1.0)
    assert jnp.allclose(out, ref, rtol=1e-5, atol=1e-5), (out, ref)

    # case 2: module defaults (gamma=0, size_average=True)
    out0 = jax.block_until_ready(normalized_focal_loss(logits, target))
    ref0 = _reference(logits, target)
    assert jnp.allclose(out0, ref0, rtol=1e-5, atol=1e-5), (out0, ref0)

    # case 3: multi-tile grid with ragged last block (no wrapper pad), sum
    N2 = 20
    logits2 = jax.random.normal(k3, (N2, C), dtype=jnp.float32)
    target2 = jax.random.randint(k4, (N2,), 0, C, dtype=jnp.int32)
    out2 = jax.block_until_ready(
        normalized_focal_loss(logits2, target2, gamma=2.0, scale=0.5,
                              size_average=False, tile_n=8))
    ref2 = _reference(logits2, target2, gamma=2.0, scale=0.5,
                      size_average=False)
    assert jnp.allclose(out2, ref2, rtol=1e-5, atol=1e-5), (out2, ref2)

    # case 3b: same ragged batch through the auto-chosen tile size
    out2b = jax.block_until_ready(
        normalized_focal_loss(logits2, target2, gamma=2.0, scale=0.5,
                              size_average=False))
    assert jnp.allclose(out2b, ref2, rtol=1e-5, atol=1e-5), (out2b, ref2)

    # case 4: fractional gamma exercises the generic jnp.power fallback
    out3 = jax.block_until_ready(
        normalized_focal_loss(logits2, target2, gamma=0.5, scale=1.0,
                              size_average=True, tile_n=8))
    ref3 = _reference(logits2, target2, gamma=0.5, scale=1.0,
                      size_average=True)
    assert jnp.allclose(out3, ref3, rtol=1e-5, atol=1e-5), (out3, ref3)

    # case 5: bf16 logits accepted end-to-end (no wrapper upcast)
    N3 = 32
    logits3 = jax.random.normal(k5, (N3, C), dtype=jnp.float32).astype(jnp.bfloat16)
    target3 = jax.random.randint(k6, (N3,), 0, C, dtype=jnp.int32)
    out4 = jax.block_until_ready(
        normalized_focal_loss(logits3, target3, gamma=2.0, scale=1.0))
    ref4 = _reference(logits3, target3, gamma=2.0, scale=1.0)
    assert jnp.allclose(out4, ref4, rtol=1e-4, atol=1e-4), (out4, ref4)

    print("KERNEL_OK")
</pallas_src>

<mosaic_0001>
module attributes {stable_mosaic.version = 11 : i64} {
  func.func @_nfl_kernel(%arg0: i32, %arg1: memref<8x1xi32, #tpu.memory_space<vmem>>, %arg2: memref<8x10xf32, #tpu.memory_space<vmem>>, %arg3: memref<8x1xf32, #tpu.memory_space<vmem>>) attributes {dimension_semantics = [#tpu.dimension_semantics<parallel>], iteration_bounds = array<i64: 1>, scalar_prefetch = 0 : i64, scratch_operands = 0 : i64, tpu.core_type = #tpu.core_type<tc>, window_params = [{transform_indices = @transform_0, window_bounds = array<i64: 8, 1>}, {transform_indices = @transform_1, window_bounds = array<i64: 8, 10>}, {transform_indices = @transform_2, window_bounds = array<i64: 8, 1>}]} {
    %c0 = arith.constant 0 : index
    %c0_0 = arith.constant 0 : index
    %0 = vector.load %arg2[%c0, %c0_0] : memref<8x10xf32, #tpu.memory_space<vmem>>, vector<8x10xf32>
    %cst = arith.constant dense<0xFF800000> : vector<8xf32>
    %1 = vector.multi_reduction <maximumf>, %0, %cst [1] : vector<8x10xf32> to vector<8xf32>
    %2 = vector.shape_cast %1 : vector<8xf32> to vector<8x1xf32>
    %3 = vector.broadcast %2 : vector<8x1xf32> to vector<8x10xf32>
    %4 = arith.subf %0, %3 : vector<8x10xf32>
    %5 = math.exp %4 : vector<8x10xf32>
    %cst_1 = arith.constant dense<0.000000e+00> : vector<8xf32>
    %6 = vector.multi_reduction <add>, %5, %cst_1 [1] : vector<8x10xf32> to vector<8xf32>
    %7 = vector.shape_cast %6 : vector<8xf32> to vector<8x1xf32>
    %8 = math.log %7 : vector<8x1xf32>
    %9 = vector.broadcast %8 : vector<8x1xf32> to vector<8x10xf32>
    %10 = arith.subf %4, %9 : vector<8x10xf32>
    %11 = vector.broadcast %7 : vector<8x1xf32> to vector<8x10xf32>
    %12 = arith.divf %5, %11 : vector<8x10xf32>
    %cst_2 = arith.constant 1.000000e+00 : f32
    %13 = vector.broadcast %cst_2 : f32 to vector<8x10xf32>
    %14 = arith.subf %13, %12 : vector<8x10xf32>
    %15 = arith.mulf %14, %14 : vector<8x10xf32>
    %cst_3 = arith.constant 0.000000e+00 : f32
    %16 = vector.broadcast %cst_3 : f32 to vector<8x10xf32>
    %17 = arith.subf %16, %10 : vector<8x10xf32>
    %18 = arith.mulf %15, %17 : vector<8x10xf32>
    %cst_4 = arith.constant dense<0.000000e+00> : vector<8xf32>
    %19 = vector.multi_reduction <add>, %18, %cst_4 [1] : vector<8x10xf32> to vector<8xf32>
    %20 = vector.shape_cast %19 : vector<8xf32> to vector<8x1xf32>
    %c0_5 = arith.constant 0 : index
    %c0_6 = arith.constant 0 : index
    %21 = vector.load %arg1[%c0_5, %c0_6] : memref<8x1xi32, #tpu.memory_space<vmem>>, vector<8x1xi32>
    %22 = tpu.iota {dimensions = array<i32: 1>} : vector<8x10xi32>
    %23 = vector.broadcast %21 : vector<8x1xi32> to vector<8x10xi32>
    %24 = arith.cmpi eq, %22, %23 : vector<8x10xi32>
    %cst_7 = arith.constant 0.000000e+00 : f32
    %25 = vector.broadcast %cst_7 : f32 to vector<8x10xf32>
    %26 = arith.select %24, %18, %25 : vector<8x10xi1>, vector<8x10xf32>
    %cst_8 = arith.constant dense<0.000000e+00> : vector<8xf32>
    %27 = vector.multi_reduction <add>, %26, %cst_8 [1] : vector<8x10xf32> to vector<8xf32>
    %28 = vector.shape_cast %27 : vector<8xf32> to vector<8x1xf32>
    %29 = arith.divf %28, %20 : vector<8x1xf32>
    %c8_i32 = arith.constant 8 : i32
    %30 = arith.muli %arg0, %c8_i32 : i32
    %31 = tpu.iota {dimensions = array<i32: 0>} : vector<8x1xi32>
    %32 = vector.broadcast %30 : i32 to vector<8x1xi32>
    %33 = arith.addi %32, %31 : vector<8x1xi32>
    %c8_i32_9 = arith.constant 8 : i32
    %34 = vector.broadcast %c8_i32_9 : i32 to vector<8x1xi32>
    %35 = arith.cmpi slt, %33, %34 : vector<8x1xi32>
    %cst_10 = arith.constant 0.000000e+00 : f32
    %36 = vector.broadcast %cst_10 : f32 to vector<8x1xf32>
    %37 = arith.select %35, %29, %36 : vector<8x1xi1>, vector<8x1xf32>
    %c0_11 = arith.constant 0 : index
    %c0_12 = arith.constant 0 : index
    %38 = vector.load %arg3[%c0_11, %c0_12] : memref<8x1xf32, #tpu.memory_space<vmem>>, vector<8x1xf32>
    tpu.vector_store %arg3[%c0_11, %c0_12], %37 {strides = array<i32>} : memref<8x1xf32, #tpu.memory_space<vmem>>, vector<8x1xf32>,
    return
  }
  func.func @transform_0(%arg0: i32) -> (i32, i32) {
    %c0_i32 = arith.constant 0 : i32
    %c0_i32_0 = arith.constant 0 : i32
    return %arg0, %c0_i32 : i32, i32
  }
  func.func @transform_1(%arg0: i32) -> (i32, i32) {
    %c0_i32 = arith.constant 0 : i32
    %c0_i32_0 = arith.constant 0 : i32
    return %arg0, %c0_i32 : i32, i32
  }
  func.func @transform_2(%arg0: i32) -> (i32, i32) {
    %c0_i32 = arith.constant 0 : i32
    %c0_i32_0 = arith.constant 0 : i32
    return %arg0, %c0_i32 : i32, i32
  }
}

</mosaic_0001>

<llo_original>
// kernel: tpu_custom_call.1
$region0: #{tpu_custom_call.1}
  #allocation0 [shape = 'u32[]', space=smem, size = 0x4, offset = 0x4, fixed_abs, tag = 'smem constant byte address 0x4 - core index']
  #allocation1 [shape = 'u32[72,128]{1,0:T(1,128)}', space=vmem, size = 0x9000, scoped, tag = 'internal scratch']
  %s0 = inlined_call_operand.vmem [shape: s32[8,1], index: 0, kind: input, shape index: {}]
  %s1 = inlined_call_operand.vmem [shape: f32[8,10], index: 1, kind: input, shape index: {}]
  %s2 = inlined_call_operand.vmem [shape: f32[8,1], index: 2, kind: output, shape index: {}]
  %s3 = sld [smem:[#allocation0]]
  $region18: #{tpu_custom_call.1} parent=0
    _
  %s5 = ssub.s32 1, %s3
  %s6 = scalar_select 0, %s5, %s3
  // Predicated region
  $region2: #{tpu_custom_call.1} parent=0 // pred_check
    _
  $region3: #{tpu_custom_call.1} parent=0 // pred_check_branch
    %8 = sbr.rel (0) target = $region5
  $region4: #{tpu_custom_call.1} parent=0 // pred_region
    _
  $region5: #{tpu_custom_call.1} parent=0 // pred_fallthru
    _
  // Predicated region
  $region6: #{tpu_custom_call.1} parent=0 // pred_check
    _
  $region7: #{tpu_custom_call.1} parent=0 // pred_check_branch
    %10 = sbr.rel (0) target = $region9
  $region8: #{tpu_custom_call.1} parent=0 // pred_region
    _
  $region9: #{tpu_custom_call.1} parent=0 // pred_fallthru
    _
  %v11 = vld [vmem:[%s1] sm:$0xff]
  %vm12 = vcmask 80896
  %v13 = vsel %vm12, %v11, -inf
  %14 = vmax.xlane.f32.xlu0 %v13
  %v15 = vpop.xlane.xlu0 %14
  %v16 = vsub.f32 %v11, %v15
  %v17 = vmul.f32 %v16, 1.442695
  %v18 = vpow.pop %v17
  %v19 = vsel %vm12, %v18, 0.0
  %20 = vadd.xlane.f32.xlu0 %v19
  %v21 = vpop.xlane.xlu0 %20
  %v22 = vlog2.pop %v21
  %v23 = vmul.f32 %v22, 0.6931472
  %v24 = vsub.f32 %v16, %v23
  %v25 = vrcp.pop %v21
  %v26 = vmul.f32 %v21, %v25
  %v27 = vsub.f32 1.0, %v26
  %v28 = vmul.f32 %v25, %v27
  %v29 = vadd.f32 %v25, %v28
  %vm30 = vweird.f32 %v21
  %vm31 = vweird.f32 %v25
  %vm32 = vmor %vm30, %vm31
  %v33 = vsel %vm32, %v25, %v29
  %v34 = vand.u32 2147483647, %v21
  %vm35 = vcmp.eq.f32.partialorder %v34, 8.507059e+37
  %v36 = vand.u32 %v21, 2147483648
  %v37 = vor.u32 1.1754944e-38, %v36
  %v38 = vsel %vm35, %v37, %v33
  %v39 = vmul.f32 %v18, %v38
  %v40 = vsub.f32 1.0, %v39
  %v41 = vmul.f32 %v40, %v40
  %v42 = vsub.f32 0.0, %v24
  %v43 = vmul.f32 %v41, %v42
  %v44 = vsel %vm12, %v43, 0.0
  %45 = vadd.xlane.f32.xlu0 %v44
  %v46 = vpop.xlane.xlu0 %45
  %v47 = vld [vmem:[%s0] sm:$0xff]
  %v48 = vlaneseq
  %v49 = vand.u32 %v48, 127
  %50 = vset.pattern.permute.xlu0 0
  %51 = vperm.xlu0 %50, %v47
  %v52 = vpop.permute.xlu0 %51
  %vm53 = vcmp.eq.s32.totalorder %v49, %v52
  %v54 = vsel %vm53, %v43, 0.0
  %v55 = vsel %vm12, %v54, 0.0
  %56 = vadd.xlane.f32.xlu0 %v55
  %v57 = vpop.xlane.xlu0 %56
  %v58 = vrcp.pop %v46
  %v59 = vmul.f32 %v46, %v58
  %v60 = vsub.f32 1.0, %v59
  %v61 = vmul.f32 %v58, %v60
  %v62 = vadd.f32 %v58, %v61
  %vm63 = vweird.f32 %v46
  %vm64 = vweird.f32 %v58
  %vm65 = vmor %vm63, %vm64
  %v66 = vsel %vm65, %v58, %v62
  %v67 = vand.u32 2147483647, %v46
  %vm68 = vcmp.eq.f32.partialorder %v67, 8.507059e+37
  %v69 = vand.u32 %v46, 2147483648
  %v70 = vor.u32 1.1754944e-38, %v69
  %v71 = vsel %vm68, %v70, %v66
  %v72 = vmul.f32 %v57, %v71
  %s73 = smul.u32 0, 8
  %v74 = vlaneseq
  %v75 = vshrl.u32 %v74, 7
  %v76 = vstv %s73
  %v77 = vadd.s32 %v76, %v75
  %vm78 = vcmp.lt.s32.totalorder %v77, 8
  %v79 = vsel %vm78, %v72, 0.0
  %vm80 = vcmask 7168
  %81 = vst.msk [vmem:[%s2] sm:$0xff] %vm80, %v79
  // Predicated region
  $region10: #{tpu_custom_call.1} parent=0 // pred_check
    _
  $region11: #{tpu_custom_call.1} parent=0 // pred_check_branch
    %83 = sbr.rel (0) target = $region13
  $region12: #{tpu_custom_call.1} parent=0 // pred_region
    _
  $region13: #{tpu_custom_call.1} parent=0 // pred_fallthru
    _
  // Predicated region
  $region14: #{tpu_custom_call.1} parent=0 // pred_check
    _
  $region15: #{tpu_custom_call.1} parent=0 // pred_check_branch
    %85 = sbr.rel (0) target = $region17
  $region16: #{tpu_custom_call.1} parent=0 // pred_region
    _
  $region17: #{tpu_custom_call.1} parent=0 // pred_fallthru
    _

</llo_original>
